<compile_context>
chip_gen: v5e
topology: v5e:2x2
jax: 0.10.0
libtpu: 0.0.40
codegen_flags: <defaults>
</compile_context>

<pallas_src>
import jax
import jax.numpy as jnp
from jax.experimental import pallas as pl
from jax.experimental.pallas import tpu as pltpu


def _round_up(v, m):
    return (v + m - 1) // m * m


def _pick_row_tile(ho, wo, cp, budget_bytes=8 << 20):
    """Largest divisor of `ho` whose double-buffered tile set fits the budget."""
    per_row = (2 * (wo + 1) * 6 * cp + 3 * wo * cp) * 4   # f32 bytes per output row
    th = int(max(1, min(ho, budget_bytes // max(per_row, 1))))
    while ho % th:
        th -= 1
    return th


def _downsample_conv_kernel(y_ref, wa_ref, wb_ref, b_ref, o_ref, acc_ref):
    # y_ref : (1, TH, Wo+1, 6*Cp)  packed input, lanes = (s, kh, c)
    # wa_ref: (6*Cp, Cp)           taps kw in {0, 1}
    # wb_ref: (3*Cp, Cp)           taps kw == 2
    # b_ref : (1, Cp)              bias
    # o_ref : (1, TH, Wo, Cp)      conv output
    # acc_ref: (TH*Wo, Cp) f32     VMEM scratch accumulator
    _, th, wop1, k6 = y_ref.shape
    wo = wop1 - 1
    cp = o_ref.shape[3]
    y = y_ref[0]                                          # (TH, Wo+1, 6*Cp)
    # pair j   -> columns (2j, 2j+1): taps kw=0 (s=0) and kw=1 (s=1)
    ya = y[:, :wo, :].reshape(th * wo, k6)
    # pair j+1 -> column 2j+2 (s=0 half of the lanes): tap kw=2
    yb = y[:, 1:, : k6 // 2].reshape(th * wo, k6 // 2)
    acc_ref[...] = jnp.dot(ya, wa_ref[...], preferred_element_type=jnp.float32)
    acc_ref[...] += jnp.dot(yb, wb_ref[...], preferred_element_type=jnp.float32)
    out = acc_ref[...] + b_ref[...]
    o_ref[0] = out.reshape(th, wo, cp).astype(o_ref.dtype)


def _avg_pool_kernel(x_ref, o_ref):
    # x_ref: (1, TH, Wo, 4*Cp)  lanes = (sh, sw, c);  o_ref: (1, TH, Wo, Cp)
    cp = o_ref.shape[3]
    x = x_ref[0].astype(jnp.float32)
    s = (x[:, :, 0:cp] + x[:, :, cp:2 * cp]
         + x[:, :, 2 * cp:3 * cp] + x[:, :, 3 * cp:4 * cp])
    o_ref[0] = (0.25 * s).astype(o_ref.dtype)


def downsample_forward(x_nchw, weight_oihw=None, bias=None, *, with_conv=True,
                       row_tile=None, compute_dtype=jnp.float32):
    """Forward pass of vqgan Downsample. x_nchw: (N, C, H, W)."""
    n, c, h, w = x_nchw.shape
    cp = _round_up(c, 128)                                # lane-dense channel dim
    x_nhwc = jnp.transpose(x_nchw, (0, 2, 3, 1))

    if not with_conv:
        # avg_pool2d(kernel=2, stride=2): pack the 2x2 window into the lane dim.
        ho, wo = h // 2, w // 2
        xq = jnp.pad(x_nhwc[:, :2 * ho, :2 * wo, :],
                     ((0, 0), (0, 0), (0, 0), (0, cp - c)))
        xq = xq.reshape(n, ho, 2, wo, 2, cp).transpose(0, 1, 3, 2, 4, 5)
        xq = xq.reshape(n, ho, wo, 4 * cp)
        th = min(ho, 256)
        while ho % th:
            th -= 1
        out_nhwc = pl.pallas_call(
            _avg_pool_kernel,
            out_shape=jax.ShapeDtypeStruct((n, ho, wo, cp), x_nchw.dtype),
            grid_spec=pltpu.PrefetchScalarGridSpec(
                num_scalar_prefetch=0,
                grid=(n, ho // th),
                in_specs=[pl.BlockSpec((1, th, wo, 4 * cp),
                                       lambda i, j: (i, j, 0, 0))],
                out_specs=pl.BlockSpec((1, th, wo, cp),
                                       lambda i, j: (i, j, 0, 0)),
            ),
            compiler_params=pltpu.CompilerParams(
                dimension_semantics=("parallel", "parallel")),
        )(xq)
        return jnp.transpose(out_nhwc[..., :c], (0, 3, 1, 2))

    # --- with_conv: zero-pad (right+1, bottom+1) then 3x3 stride-2 VALID conv ---
    ho = (h - 2) // 2 + 1
    wo = (w - 2) // 2 + 1
    hp = 2 * ho + 1            # rows read by the conv (includes the bottom pad row)
    wp = 2 * wo + 2            # padded to an even width so columns pair cleanly
    xpad = jnp.pad(x_nhwc, ((0, 0), (0, hp - h), (0, wp - w), (0, cp - c)))

    # Row-tripled, column-paired layout: y[n,i,p,s,kh,c] = xpad[n, 2i+kh, 2p+s, c]
    xpair = xpad.reshape(n, hp, wo + 1, 2, cp)
    y = jnp.stack([xpair[:, kh:kh + 2 * ho:2] for kh in range(3)], axis=4)
    y = y.reshape(n, ho, wo + 1, 6 * cp).astype(compute_dtype)

    # Weights: OIHW -> HWIO, zero-pad channels, split kw in {0,1} vs kw == 2.
    w_hwio = jnp.transpose(weight_oihw, (2, 3, 1, 0))
    w_hwio = jnp.pad(w_hwio, ((0, 0), (0, 0), (0, cp - c), (0, cp - c)))
    wa = jnp.transpose(w_hwio[:, 0:2], (1, 0, 2, 3)).reshape(6 * cp, cp)  # (s,kh,ci)
    wb = w_hwio[:, 2].reshape(3 * cp, cp)                                 # (kh,ci)
    wa = wa.astype(compute_dtype)
    wb = wb.astype(compute_dtype)
    b2 = jnp.pad(bias, (0, cp - c)).reshape(1, cp).astype(jnp.float32)

    th = row_tile if row_tile is not None else _pick_row_tile(ho, wo, cp)
    th = max(1, min(th, ho))
    while ho % th:
        th -= 1

    # VMEM budget: double-buffered in/out blocks + scratch + resident weights.
    esize = jnp.dtype(compute_dtype).itemsize
    need = (2 * th * (wo + 1) * 6 * cp * esize            # input blocks
            + 2 * th * wo * cp * 4                        # output blocks
            + th * wo * cp * 4                            # f32 scratch accumulator
            + (6 * cp * cp + 3 * cp * cp) * esize + cp * 4)
    vmem_limit = int(min(64 << 20, max(16 << 20, 2 * need)))

    out_nhwc = pl.pallas_call(
        _downsample_conv_kernel,
        out_shape=jax.ShapeDtypeStruct((n, ho, wo, cp), x_nchw.dtype),
        grid_spec=pltpu.PrefetchScalarGridSpec(
            num_scalar_prefetch=0,
            grid=(n, ho // th),
            in_specs=[
                pl.BlockSpec((1, th, wo + 1, 6 * cp), lambda i, j: (i, j, 0, 0)),
                pl.BlockSpec((6 * cp, cp), lambda i, j: (0, 0)),
                pl.BlockSpec((3 * cp, cp), lambda i, j: (0, 0)),
                pl.BlockSpec((1, cp), lambda i, j: (0, 0)),
            ],
            out_specs=pl.BlockSpec((1, th, wo, cp), lambda i, j: (i, j, 0, 0)),
            scratch_shapes=[pltpu.VMEM((th * wo, cp), jnp.float32)],
        ),
        compiler_params=pltpu.CompilerParams(
            dimension_semantics=("parallel", "parallel"),
            vmem_limit_bytes=vmem_limit),
    )(y, wa, wb, b2)

    return jnp.transpose(out_nhwc[..., :c], (0, 3, 1, 2))


if __name__ == "__main__":
    N, C, H, W = 2, 4, 16, 16
    key = jax.random.PRNGKey(0)
    kx, kw_, kb = jax.random.split(key, 3)
    x = jax.random.normal(kx, (N, C, H, W), dtype=jnp.float32)

    # Deterministic Conv2d(C, C, 3, 3) params (PyTorch-style uniform init bounds).
    fan_in = C * 3 * 3
    bound = 1.0 / (fan_in ** 0.5)
    weight = jax.random.uniform(kw_, (C, C, 3, 3), jnp.float32, -bound, bound)  # OIHW
    bias = jax.random.uniform(kb, (C,), jnp.float32, -bound, bound)

    # with_conv=True path (row_tile=4 -> grid (2, 2); exercises spatial tiling).
    out = downsample_forward(x, weight, bias, with_conv=True, row_tile=4)
    out = jax.block_until_ready(out)
    Ho = (H - 2) // 2 + 1
    Wo = (W - 2) // 2 + 1
    assert out.shape == (N, C, Ho, Wo), out.shape

    # Reference: pad (left 0, right 1, top 0, bottom 1) then stride-2 VALID conv.
    x_pad = jnp.pad(x, ((0, 0), (0, 0), (0, 1), (0, 1)))
    ref = jax.lax.conv_general_dilated(
        x_pad, weight, window_strides=(2, 2), padding="VALID",
        dimension_numbers=("NCHW", "OIHW", "NCHW")) + bias.reshape(1, C, 1, 1)
    err = float(jnp.max(jnp.abs(out - ref)))
    assert jnp.allclose(out, ref, atol=1e-4, rtol=1e-4), err

    # with_conv=False path (avg_pool2d kernel=2 stride=2).
    outp = jax.block_until_ready(downsample_forward(x, with_conv=False))
    refp = x.reshape(N, C, H // 2, 2, W // 2, 2).mean(axis=(3, 5))
    assert outp.shape == refp.shape, outp.shape
    errp = float(jnp.max(jnp.abs(outp - refp)))
    assert jnp.allclose(outp, refp, atol=1e-5, rtol=1e-5), errp

    print("KERNEL_OK")
</pallas_src>

<mosaic_0001>
module attributes {stable_mosaic.version = 11 : i64} {
  func.func @_downsample_conv_kernel(%arg0: i32, %arg1: i32, %arg2: memref<1x4x9x768xf32, #tpu.memory_space<vmem>>, %arg3: memref<768x128xf32, #tpu.memory_space<vmem>>, %arg4: memref<384x128xf32, #tpu.memory_space<vmem>>, %arg5: memref<1x128xf32, #tpu.memory_space<vmem>>, %arg6: memref<1x4x8x128xf32, #tpu.memory_space<vmem>>, %arg7: memref<32x128xf32, #tpu.memory_space<vmem>>) attributes {dimension_semantics = [#tpu.dimension_semantics<parallel>, #tpu.dimension_semantics<parallel>], iteration_bounds = array<i64: 2, 2>, scalar_prefetch = 0 : i64, scratch_operands = 1 : i64, tpu.core_type = #tpu.core_type<tc>, window_params = [{transform_indices = @transform_0, window_bounds = array<i64: 1, 4, 9, 768>}, {pipeline_mode = #tpu.pipeline_mode<synchronous>, transform_indices = @transform_1, window_bounds = array<i64: 768, 128>}, {pipeline_mode = #tpu.pipeline_mode<synchronous>, transform_indices = @transform_2, window_bounds = array<i64: 384, 128>}, {pipeline_mode = #tpu.pipeline_mode<synchronous>, transform_indices = @transform_3, window_bounds = array<i64: 1, 128>}, {transform_indices = @transform_4, window_bounds = array<i64: 1, 4, 8, 128>}]} {
    %c0 = arith.constant 0 : index
    %c0_0 = arith.constant 0 : index
    %c0_1 = arith.constant 0 : index
    %c0_2 = arith.constant 0 : index
    %0 = vector.load %arg2[%c0, %c0_0, %c0_1, %c0_2] : memref<1x4x9x768xf32, #tpu.memory_space<vmem>>, vector<1x4x9x768xf32>
    %1 = vector.shape_cast %0 : vector<1x4x9x768xf32> to vector<4x9x768xf32>
    %2 = vector.extract_strided_slice %1 {offsets = [0, 0, 0], sizes = [4, 8, 768], strides = [1, 1, 1]} : vector<4x9x768xf32> to vector<4x8x768xf32>
    %3 = vector.shape_cast %2 : vector<4x8x768xf32> to vector<32x768xf32>
    %4 = vector.extract_strided_slice %1 {offsets = [0, 1, 0], sizes = [4, 8, 384], strides = [1, 1, 1]} : vector<4x9x768xf32> to vector<4x8x384xf32>
    %5 = vector.shape_cast %4 : vector<4x8x384xf32> to vector<32x384xf32>
    %c0_3 = arith.constant 0 : index
    %c0_4 = arith.constant 0 : index
    %6 = vector.load %arg3[%c0_3, %c0_4] : memref<768x128xf32, #tpu.memory_space<vmem>>, vector<768x128xf32>
    %cst = arith.constant dense<0.000000e+00> : vector<32x128xf32>
    %7 = tpu.matmul %3, %6, %cst {dimension_numbers = #tpu.dot_dimension_numbers<[1], [0], [0], [1], [0, 0, 1, 1], [], []>} : vector<32x768xf32>, vector<768x128xf32>, vector<32x128xf32> -> vector<32x128xf32>
    %c0_5 = arith.constant 0 : index
    %c0_6 = arith.constant 0 : index
    %8 = vector.load %arg7[%c0_5, %c0_6] : memref<32x128xf32, #tpu.memory_space<vmem>>, vector<32x128xf32>
    tpu.vector_store %arg7[%c0_5, %c0_6], %7 {strides = array<i32>} : memref<32x128xf32, #tpu.memory_space<vmem>>, vector<32x128xf32>,
    %c0_7 = arith.constant 0 : index
    %c0_8 = arith.constant 0 : index
    %9 = vector.load %arg7[%c0_7, %c0_8] : memref<32x128xf32, #tpu.memory_space<vmem>>, vector<32x128xf32>
    %c0_9 = arith.constant 0 : index
    %c0_10 = arith.constant 0 : index
    %10 = vector.load %arg4[%c0_9, %c0_10] : memref<384x128xf32, #tpu.memory_space<vmem>>, vector<384x128xf32>
    %cst_11 = arith.constant dense<0.000000e+00> : vector<32x128xf32>
    %11 = tpu.matmul %5, %10, %cst_11 {dimension_numbers = #tpu.dot_dimension_numbers<[1], [0], [0], [1], [0, 0, 1, 1], [], []>} : vector<32x384xf32>, vector<384x128xf32>, vector<32x128xf32> -> vector<32x128xf32>
    %12 = arith.addf %9, %11 : vector<32x128xf32>
    %c0_12 = arith.constant 0 : index
    %c0_13 = arith.constant 0 : index
    %13 = vector.load %arg7[%c0_12, %c0_13] : memref<32x128xf32, #tpu.memory_space<vmem>>, vector<32x128xf32>
    tpu.vector_store %arg7[%c0_12, %c0_13], %12 {strides = array<i32>} : memref<32x128xf32, #tpu.memory_space<vmem>>, vector<32x128xf32>,
    %c0_14 = arith.constant 0 : index
    %c0_15 = arith.constant 0 : index
    %14 = vector.load %arg7[%c0_14, %c0_15] : memref<32x128xf32, #tpu.memory_space<vmem>>, vector<32x128xf32>
    %c0_16 = arith.constant 0 : index
    %c0_17 = arith.constant 0 : index
    %15 = vector.load %arg5[%c0_16, %c0_17] : memref<1x128xf32, #tpu.memory_space<vmem>>, vector<1x128xf32>
    %16 = vector.broadcast %15 : vector<1x128xf32> to vector<32x128xf32>
    %17 = arith.addf %14, %16 : vector<32x128xf32>
    %18 = vector.shape_cast %17 : vector<32x128xf32> to vector<4x8x128xf32>
    %c0_18 = arith.constant 0 : index
    %c0_19 = arith.constant 0 : index
    %c0_20 = arith.constant 0 : index
    %c0_21 = arith.constant 0 : index
    %19 = vector.load %arg6[%c0_18, %c0_19, %c0_20, %c0_21] : memref<1x4x8x128xf32, #tpu.memory_space<vmem>>, vector<1x4x8x128xf32>
    %20 = vector.shape_cast %19 : vector<1x4x8x128xf32> to vector<4x8x128xf32>
    %21 = vector.shape_cast %18 : vector<4x8x128xf32> to vector<1x4x8x128xf32>
    tpu.vector_store %arg6[%c0_18, %c0_19, %c0_20, %c0_21], %21 {strides = array<i32>} : memref<1x4x8x128xf32, #tpu.memory_space<vmem>>, vector<1x4x8x128xf32>,
    return
  }
  func.func @transform_0(%arg0: i32, %arg1: i32) -> (i32, i32, i32, i32) {
    %c0_i32 = arith.constant 0 : i32
    %c0_i32_0 = arith.constant 0 : i32
    %c0_i32_1 = arith.constant 0 : i32
    return %arg0, %arg1, %c0_i32, %c0_i32_0 : i32, i32, i32, i32
  }
  func.func @transform_1(%arg0: i32, %arg1: i32) -> (i32, i32) {
    %c0_i32 = arith.constant 0 : i32
    %c0_i32_0 = arith.constant 0 : i32
    %c0_i32_1 = arith.constant 0 : i32
    return %c0_i32, %c0_i32_0 : i32, i32
  }
  func.func @transform_2(%arg0: i32, %arg1: i32) -> (i32, i32) {
    %c0_i32 = arith.constant 0 : i32
    %c0_i32_0 = arith.constant 0 : i32
    %c0_i32_1 = arith.constant 0 : i32
    return %c0_i32, %c0_i32_0 : i32, i32
  }
  func.func @transform_3(%arg0: i32, %arg1: i32) -> (i32, i32) {
    %c0_i32 = arith.constant 0 : i32
    %c0_i32_0 = arith.constant 0 : i32
    %c0_i32_1 = arith.constant 0 : i32
    return %c0_i32, %c0_i32_0 : i32, i32
  }
  func.func @transform_4(%arg0: i32, %arg1: i32) -> (i32, i32, i32, i32) {
    %c0_i32 = arith.constant 0 : i32
    %c0_i32_0 = arith.constant 0 : i32
    %c0_i32_1 = arith.constant 0 : i32
    return %arg0, %arg1, %c0_i32, %c0_i32_0 : i32, i32, i32, i32
  }
}

</mosaic_0001>

<llo_original>
// kernel: tpu_custom_call.1
$region0: #{tpu_custom_call.1}
  #allocation0 [shape = 'u32[]', space=smem, size = 0x4, offset = 0x4, fixed_abs, tag = 'smem constant byte address 0x4 - core index']
  #allocation1 [shape = 'u32[72,128]{1,0:T(1,128)}', space=vmem, size = 0x9000, scoped, tag = 'internal scratch']
  #allocation2 [shape = 'f32[32,128]{1,0:T(8,128)}', space=vmem, size = 0x4000, scoped, tag = 'scratch operand']
  %s0 = inlined_call_operand.vmem [shape: f32[2,8,9,768], index: 0, kind: input, shape index: {}]
  %s1 = inlined_call_operand.vmem [shape: f32[768,128], index: 1, kind: input, shape index: {}]
  %s2 = inlined_call_operand.vmem [shape: f32[384,128], index: 2, kind: input, shape index: {}]
  %s3 = inlined_call_operand.vmem [shape: f32[1,128], index: 3, kind: input, shape index: {}]
  %s4 = inlined_call_operand.hbm [shape: f32[2,8,8,128], index: 4, kind: output, shape index: {}]
  %s5 = sld [smem:[#allocation0]]
  $region49: #{tpu_custom_call.1} parent=0
    _
  %s7 = ssub.s32 1, %s5
  %s8 = scalar_select 0, %s7, %s5
  $region1: #{tpu_custom_call.1} parent=0
    #allocation3 [shape = 'u8[32768]{0}', space=vmem, size = 0x8000, scoped, tag = 'output window, operand 0']
    #allocation4 [shape = 's32[2]{0}', space=sflag, size = 0x8, scoped, tag = 'scoped memory for tpu_custom_call.1']
    %9 = vsyncpa [#allocation4], 0
    %s10 = scalar_lea.sflag [#allocation4], 1
    %11 = vsyncpa %s10, 0
    loop: start=0, step=1, limit=6
    $region2: #{tpu_custom_call.1} parent=1 // loop_pre_header
      _
    $region3: #{tpu_custom_call.1} parent=1 // loop_header
      %s13 = sphi 0, %s17
      %p14 = scmp.ge.s32.totalorder %s13, 6
      %s20 = sphi 0, %s32
      %s21 = sphi 0, %s28
      %s22 = sphi 0, %s20
      %s23 = sphi 0, %s21
      %s24 = sphi 0, %s22
      %s25 = sphi 0, %s23
      %s37 = sphi 0, %s39
      %s40 = sphi 0, %s37
      %s41 = sphi 0, %s40
      %s57 = sphi 0, %s41
      %s61 = sphi 0, %s61
      %s63 = sphi 0, %s61
      %s64 = sphi 0, %s63
      %s78 = sphi 0, %s64
      %s82 = sphi 0, %s82
      %s84 = sphi 0, %s82
      %s85 = sphi 0, %s84
      %s99 = sphi 0, %s85
      %s103 = sphi 0, %s103
      %s105 = sphi 0, %s103
      %s106 = sphi 0, %s105
      %s120 = sphi 0, %s106
      %s128 = sphi 0, %s130
      %s131 = sphi 0, %s128
      %s132 = sphi 0, %s131
      %s148 = sphi 0, %s132
    $region4: #{tpu_custom_call.1} parent=1 // loop_header_branch
      %16 = sbr.rel (%p14) target = $region8
    $region5: #{tpu_custom_call.1} parent=1 // loop_body
      %s18 = ssub.s32 %s13, 1
      %s19 = ssub.s32 %s13, 2
      %s26 = sadd.s32 1, %s21
      %p27 = scmp.ge.s32.totalorder %s26, 2
      %s28 = scalar_select %p27, 0, %s26
      %s29 = sadd.s32 1, %s20
      %s30 = scalar_select %p27, %s29, %s20
      %p31 = scmp.ge.s32.totalorder %s30, 2
      %s32 = scalar_select %p31, 0, %s30
      %s33 = ssub.s32 %s20, %s32
      %s34 = ssub.s32 %s21, %s28
      %s35 = sor.u32 %s33, %s34
      %p36 = scmp.eq.s32.totalorder %s35, 0
      %s38 = sadd.s32 %s37, 1
      %s39 = scalar_select %p36, %s37, %s38
      %p42 = pneg %p36
      %p43 = scmp.eq.s32.totalorder %s13, 3
      %p44 = por %p42, %p43
      %p45 = scmp.ne.s32.totalorder %s37, %s40
      %p46 = scmp.eq.s32.totalorder %s13, 0
      %p47 = por %p45, %p46
      %p48 = scmp.ne.s32.totalorder %s37, %s40
      %p49 = scmp.eq.s32.totalorder %s18, 3
      %p50 = por %p48, %p49
      %p51 = scmp.ne.s32.totalorder %s40, %s41
      %p52 = scmp.eq.s32.totalorder %s18, 0
      %p53 = por %p51, %p52
      %p54 = scmp.ne.s32.totalorder %s40, %s41
      %p55 = scmp.eq.s32.totalorder %s19, 3
      %p56 = por %p54, %p55
      %p58 = scmp.ne.s32.totalorder %s41, %s57
      %p59 = scmp.eq.s32.totalorder %s19, 0
      %p60 = por %p58, %p59
      %s62 = sadd.s32 %s61, 1
      %p65 = scmp.eq.s32.totalorder %s13, 3
      %p66 = scmp.ne.s32.totalorder %s61, %s63
      %p67 = scmp.eq.s32.totalorder %s13, 0
      %p68 = por %p66, %p67
      %p69 = scmp.ne.s32.totalorder %s61, %s63
      %p70 = scmp.eq.s32.totalorder %s18, 3
      %p71 = por %p69, %p70
      %p72 = scmp.ne.s32.totalorder %s63, %s64
      %p73 = scmp.eq.s32.totalorder %s18, 0
      %p74 = por %p72, %p73
      %p75 = scmp.ne.s32.totalorder %s63, %s64
      %p76 = scmp.eq.s32.totalorder %s19, 3
      %p77 = por %p75, %p76
      %p79 = scmp.ne.s32.totalorder %s64, %s78
      %p80 = scmp.eq.s32.totalorder %s19, 0
      %p81 = por %p79, %p80
      %s83 = sadd.s32 %s82, 1
      %p86 = scmp.eq.s32.totalorder %s13, 3
      %p87 = scmp.ne.s32.totalorder %s82, %s84
      %p88 = scmp.eq.s32.totalorder %s13, 0
      %p89 = por %p87, %p88
      %p90 = scmp.ne.s32.totalorder %s82, %s84
      %p91 = scmp.eq.s32.totalorder %s18, 3
      %p92 = por %p90, %p91
      %p93 = scmp.ne.s32.totalorder %s84, %s85
      %p94 = scmp.eq.s32.totalorder %s18, 0
      %p95 = por %p93, %p94
      %p96 = scmp.ne.s32.totalorder %s84, %s85
      %p97 = scmp.eq.s32.totalorder %s19, 3
      %p98 = por %p96, %p97
      %p100 = scmp.ne.s32.totalorder %s85, %s99
      %p101 = scmp.eq.s32.totalorder %s19, 0
      %p102 = por %p100, %p101
      %s104 = sadd.s32 %s103, 1
      %p107 = scmp.eq.s32.totalorder %s13, 3
      %p108 = scmp.ne.s32.totalorder %s103, %s105
      %p109 = scmp.eq.s32.totalorder %s13, 0
      %p110 = por %p108, %p109
      %p111 = scmp.ne.s32.totalorder %s103, %s105
      %p112 = scmp.eq.s32.totalorder %s18, 3
      %p113 = por %p111, %p112
      %p114 = scmp.ne.s32.totalorder %s105, %s106
      %p115 = scmp.eq.s32.totalorder %s18, 0
      %p116 = por %p114, %p115
      %p117 = scmp.ne.s32.totalorder %s105, %s106
      %p118 = scmp.eq.s32.totalorder %s19, 3
      %p119 = por %p117, %p118
      %p121 = scmp.ne.s32.totalorder %s106, %s120
      %p122 = scmp.eq.s32.totalorder %s19, 0
      %p123 = por %p121, %p122
      %s124 = ssub.s32 %s20, %s32
      %s125 = ssub.s32 %s21, %s28
      %s126 = sor.u32 %s124, %s125
      %p127 = scmp.eq.s32.totalorder %s126, 0
      %s129 = sadd.s32 %s128, 1
      %s130 = scalar_select %p127, %s128, %s129
      %p133 = pneg %p127
      %p134 = scmp.eq.s32.totalorder %s13, 3
      %p135 = por %p133, %p134
      %p136 = scmp.ne.s32.totalorder %s128, %s131
      %p137 = scmp.eq.s32.totalorder %s13, 0
      %p138 = por %p136, %p137
      %p139 = scmp.ne.s32.totalorder %s128, %s131
      %p140 = scmp.eq.s32.totalorder %s18, 3
      %p141 = por %p139, %p140
      %p142 = scmp.ne.s32.totalorder %s131, %s132
      %p143 = scmp.eq.s32.totalorder %s18, 0
      %p144 = por %p142, %p143
      %p145 = scmp.ne.s32.totalorder %s131, %s132
      %p146 = scmp.eq.s32.totalorder %s19, 3
      %p147 = por %p145, %p146
      %p149 = scmp.ne.s32.totalorder %s132, %s148
      %p150 = scmp.eq.s32.totalorder %s19, 0
      %p151 = por %p149, %p150
      %p152 = scmp.le.s32.totalorder 1, %s13
      %p153 = scmp.lt.s32.totalorder %s13, 5
      %p154 = pnand %p152, %p153
      %p155 = pneg %p154
      // Predicated region
      $region9: #{tpu_custom_call.1} parent=5 // pred_check
        _
      $region10: #{tpu_custom_call.1} parent=5 // pred_check_branch
        %157 = sbr.rel (%p154) target = $region12
      $region11: #{tpu_custom_call.1} parent=5 // pred_region
        %s158 = ssub.s32 %s13, 1
        // Predicated region
        $region13: #{tpu_custom_call.1} parent=11 // pred_check
          %p159 = pneg %p74
        $region14: #{tpu_custom_call.1} parent=11 // pred_check_branch
          %161 = sbr.rel (%p159) target = $region16
        $region15: #{tpu_custom_call.1} parent=11 // pred_region
          _
        $region16: #{tpu_custom_call.1} parent=11 // pred_fallthru
          _
        // Predicated region
        $region17: #{tpu_custom_call.1} parent=11 // pred_check
          %p162 = pneg %p95
        $region18: #{tpu_custom_call.1} parent=11 // pred_check_branch
          %164 = sbr.rel (%p162) target = $region20
        $region19: #{tpu_custom_call.1} parent=11 // pred_region
          _
        $region20: #{tpu_custom_call.1} parent=11 // pred_fallthru
          _
        // Predicated region
        $region21: #{tpu_custom_call.1} parent=11 // pred_check
          %p165 = pneg %p116
        $region22: #{tpu_custom_call.1} parent=11 // pred_check_branch
          %167 = sbr.rel (%p165) target = $region24
        $region23: #{tpu_custom_call.1} parent=11 // pred_region
          _
        $region24: #{tpu_custom_call.1} parent=11 // pred_fallthru
          _
      $region12: #{tpu_custom_call.1} parent=5 // pred_fallthru
        _
      %p168 = scmp.lt.s32.totalorder %s13, 4
      // Predicated region
      $region25: #{tpu_custom_call.1} parent=5 // pred_check
        %p169 = pneg %p168
      $region26: #{tpu_custom_call.1} parent=5 // pred_check_branch
        %171 = sbr.rel (%p169) target = $region28
      $region27: #{tpu_custom_call.1} parent=5 // pred_region
        // Predicated region
        $region29: #{tpu_custom_call.1} parent=27 // pred_check
          %p172 = pneg %p47
        $region30: #{tpu_custom_call.1} parent=27 // pred_check_branch
          %174 = sbr.rel (%p172) target = $region32
        $region31: #{tpu_custom_call.1} parent=27 // pred_region
          %s175 = smul.u32 4, %s21
          %p176 = scmp.lt.s32.totalorder %s20, 1
          %s177 = scalar_select %p176, %s20, 1
          %p178 = scmp.lt.s32.totalorder %s175, 7
          %s179 = scalar_select %p178, %s175, 7
          %s180 = smul.addr %s179, 12
          %s181 = smul.addr %s177, 96
          %s182 = sadd.s32 %s180, %s181
          %s183 = smul.addr %s182, 8
          %s184 = scalar_lea.vmem %s0, %s183
          %s185 = smul.u32 4, %s21
        $region32: #{tpu_custom_call.1} parent=27 // pred_fallthru
          _
      $region28: #{tpu_custom_call.1} parent=5 // pred_fallthru
        _
      %p186 = scmp.le.s32.totalorder 1, %s13
      %p187 = scmp.lt.s32.totalorder %s13, 5
      %p188 = pnand %p186, %p187
      %p189 = pneg %p188
      // Predicated region
      $region33: #{tpu_custom_call.1} parent=5 // pred_check
        _
      $region34: #{tpu_custom_call.1} parent=5 // pred_check_branch
        %191 = sbr.rel (%p188) target = $region36
      $region35: #{tpu_custom_call.1} parent=5 // pred_region
        %s192 = ssub.s32 %s13, 1
        %s193 = smul.u32 4, %s23
        %p194 = scmp.lt.s32.totalorder %s22, 1
        %s195 = scalar_select %p194, %s22, 1
        %p196 = scmp.lt.s32.totalorder %s193, 7
        %s197 = scalar_select %p196, %s193, 7
        %s198 = smul.addr %s197, 12
        %s199 = smul.addr %s195, 96
        %s200 = sadd.s32 %s198, %s199
        %s201 = smul.addr %s200, 8
        %s202 = scalar_lea.vmem %s0, %s201
        %p203 = pneg %p53
        %p204 = pneg %p50
        %p205 = pneg %p74
        %p206 = pneg %p71
        %p207 = pneg %p95
        %p208 = pneg %p92
        %p209 = pneg %p116
        %p210 = pneg %p113
        %p211 = pneg %p144
        %p212 = pneg %p141
        %s213 = sand.u32 %s131, 1
        %s214 = scalar_lea.sflag [#allocation4], %s213
        %s215 = sand.u32 %s131, 1
        %s216 = smul.addr %s215, 32
        %s217 = scalar_lea.vmem [#allocation3], %s216
        %s218 = smul.u32 4, %s23
        %p219 = scmp.lt.s32.totalorder %s22, 1
        %s220 = scalar_select %p219, %s22, 1
        %p221 = scmp.lt.s32.totalorder %s218, 7
        %s222 = scalar_select %p221, %s218, 7
        %s223 = smul.addr %s222, 12
        %s224 = smul.addr %s220, 96
        %s225 = sadd.s32 %s223, %s224
        %s226 = smul.addr %s225, 8
        %s227 = scalar_lea.vmem %s0, %s226
        %s228 = smul.u32 4, %s23
        %s229 = smul.u32 4, %s23
        %v230 = vld [vmem:[%s227] sm:$0xff]
        %v231 = vld [vmem:[%s227 + $0x8] sm:$0xff]
        %v232 = vld [vmem:[%s227 + $0x10] sm:$0xff]
        %v233 = vld [vmem:[%s227 + $0x18] sm:$0xff]
        %v234 = vld [vmem:[%s227 + $0x20] sm:$0xff]
        %v235 = vld [vmem:[%s227 + $0x28] sm:$0xff]
        %v236 = vld [vmem:[%s227 + $0x30] sm:$0x1]
        %v237 = vld [vmem:[%s227 + $0x38] sm:$0x1]
        %v238 = vld [vmem:[%s227 + $0x40] sm:$0x1]
        %v239 = vld [vmem:[%s227 + $0x60] sm:$0xff]
        %v240 = vld [vmem:[%s227 + $0x68] sm:$0xff]
        %v241 = vld [vmem:[%s227 + $0x70] sm:$0xff]
        %v242 = vld [vmem:[%s227 + $0x78] sm:$0xff]
        %v243 = vld [vmem:[%s227 + $0x80] sm:$0xff]
        %v244 = vld [vmem:[%s227 + $0x88] sm:$0xff]
        %v245 = vld [vmem:[%s227 + $0x90] sm:$0x1]
        %v246 = vld [vmem:[%s227 + $0x98] sm:$0x1]
        %v247 = vld [vmem:[%s227 + $0xa0] sm:$0x1]
        %v248 = vld [vmem:[%s227 + $0xc0] sm:$0xff]
        %v249 = vld [vmem:[%s227 + $0xc8] sm:$0xff]
        %v250 = vld [vmem:[%s227 + $0xd0] sm:$0xff]
        %v251 = vld [vmem:[%s227 + $0xd8] sm:$0xff]
        %v252 = vld [vmem:[%s227 + $0xe0] sm:$0xff]
        %v253 = vld [vmem:[%s227 + $0xe8] sm:$0xff]
        %v254 = vld [vmem:[%s227 + $0xf0] sm:$0x1]
        %v255 = vld [vmem:[%s227 + $0xf8] sm:$0x1]
        %v256 = vld [vmem:[%s227 + $0x100] sm:$0x1]
        %v257 = vld [vmem:[%s227 + $0x120] sm:$0xff]
        %v258 = vld [vmem:[%s227 + $0x128] sm:$0xff]
        %v259 = vld [vmem:[%s227 + $0x130] sm:$0xff]
        %v260 = vld [vmem:[%s227 + $0x138] sm:$0xff]
        %v261 = vld [vmem:[%s227 + $0x140] sm:$0xff]
        %v262 = vld [vmem:[%s227 + $0x148] sm:$0xff]
        %v263 = vld [vmem:[%s227 + $0x150] sm:$0x1]
        %v264 = vld [vmem:[%s227 + $0x158] sm:$0x1]
        %v265 = vld [vmem:[%s227 + $0x160] sm:$0x1]
        %vm290 = vcmask 1046528
        %v291 = vrot.slane %v230, 1
        %v292 = vrot.slane %v236, 1
        %v293 = vsel %vm290, %v291, %v292
        %v294 = vrot.slane %v231, 1
        %v295 = vrot.slane %v237, 1
        %v296 = vsel %vm290, %v294, %v295
        %v297 = vrot.slane %v232, 1
        %v298 = vrot.slane %v238, 1
        %v299 = vsel %vm290, %v297, %v298
        %v300 = vrot.slane %v239, 1
        %v301 = vrot.slane %v245, 1
        %v302 = vsel %vm290, %v300, %v301
        %v303 = vrot.slane %v240, 1
        %v304 = vrot.slane %v246, 1
        %v305 = vsel %vm290, %v303, %v304
        %v306 = vrot.slane %v241, 1
        %v307 = vrot.slane %v247, 1
        %v308 = vsel %vm290, %v306, %v307
        %v309 = vrot.slane %v248, 1
        %v310 = vrot.slane %v254, 1
        %v311 = vsel %vm290, %v309, %v310
        %v312 = vrot.slane %v249, 1
        %v313 = vrot.slane %v255, 1
        %v314 = vsel %vm290, %v312, %v313
        %v315 = vrot.slane %v250, 1
        %v316 = vrot.slane %v256, 1
        %v317 = vsel %vm290, %v315, %v316
        %v318 = vrot.slane %v257, 1
        %v319 = vrot.slane %v263, 1
        %v320 = vsel %vm290, %v318, %v319
        %v321 = vrot.slane %v258, 1
        %v322 = vrot.slane %v264, 1
        %v323 = vsel %vm290, %v321, %v322
        %v324 = vrot.slane %v259, 1
        %v325 = vrot.slane %v265, 1
        %v326 = vsel %vm290, %v324, %v325
        %v339 = vld [vmem:[%s1] sm:$0xff]
        %v340 = vld [vmem:[%s1 + $0x8] sm:$0xff]
        %v341 = vld [vmem:[%s1 + $0x10] sm:$0xff]
        %v342 = vld [vmem:[%s1 + $0x18] sm:$0xff]
        %v343 = vld [vmem:[%s1 + $0x20] sm:$0xff]
        %v344 = vld [vmem:[%s1 + $0x28] sm:$0xff]
        %v345 = vld [vmem:[%s1 + $0x30] sm:$0xff]
        %v346 = vld [vmem:[%s1 + $0x38] sm:$0xff]
        %v347 = vld [vmem:[%s1 + $0x40] sm:$0xff]
        %v348 = vld [vmem:[%s1 + $0x48] sm:$0xff]
        %v349 = vld [vmem:[%s1 + $0x50] sm:$0xff]
        %v350 = vld [vmem:[%s1 + $0x58] sm:$0xff]
        %v351 = vld [vmem:[%s1 + $0x60] sm:$0xff]
        %v352 = vld [vmem:[%s1 + $0x68] sm:$0xff]
        %v353 = vld [vmem:[%s1 + $0x70] sm:$0xff]
        %v354 = vld [vmem:[%s1 + $0x78] sm:$0xff]
        %v355 = vld [vmem:[%s1 + $0x80] sm:$0xff]
        %v356 = vld [vmem:[%s1 + $0x88] sm:$0xff]
        %v357 = vld [vmem:[%s1 + $0x90] sm:$0xff]
        %v358 = vld [vmem:[%s1 + $0x98] sm:$0xff]
        %v359 = vld [vmem:[%s1 + $0xa0] sm:$0xff]
        %v360 = vld [vmem:[%s1 + $0xa8] sm:$0xff]
        %v361 = vld [vmem:[%s1 + $0xb0] sm:$0xff]
        %v362 = vld [vmem:[%s1 + $0xb8] sm:$0xff]
        %v363 = vld [vmem:[%s1 + $0xc0] sm:$0xff]
        %v364 = vld [vmem:[%s1 + $0xc8] sm:$0xff]
        %v365 = vld [vmem:[%s1 + $0xd0] sm:$0xff]
        %v366 = vld [vmem:[%s1 + $0xd8] sm:$0xff]
        %v367 = vld [vmem:[%s1 + $0xe0] sm:$0xff]
        %v368 = vld [vmem:[%s1 + $0xe8] sm:$0xff]
        %v369 = vld [vmem:[%s1 + $0xf0] sm:$0xff]
        %v370 = vld [vmem:[%s1 + $0xf8] sm:$0xff]
        %v371 = vld [vmem:[%s1 + $0x100] sm:$0xff]
        %v372 = vld [vmem:[%s1 + $0x108] sm:$0xff]
        %v373 = vld [vmem:[%s1 + $0x110] sm:$0xff]
        %v374 = vld [vmem:[%s1 + $0x118] sm:$0xff]
        %v375 = vld [vmem:[%s1 + $0x120] sm:$0xff]
        %v376 = vld [vmem:[%s1 + $0x128] sm:$0xff]
        %v377 = vld [vmem:[%s1 + $0x130] sm:$0xff]
        %v378 = vld [vmem:[%s1 + $0x138] sm:$0xff]
        %v379 = vld [vmem:[%s1 + $0x140] sm:$0xff]
        %v380 = vld [vmem:[%s1 + $0x148] sm:$0xff]
        %v381 = vld [vmem:[%s1 + $0x150] sm:$0xff]
        %v382 = vld [vmem:[%s1 + $0x158] sm:$0xff]
        %v383 = vld [vmem:[%s1 + $0x160] sm:$0xff]
        %v384 = vld [vmem:[%s1 + $0x168] sm:$0xff]
        %v385 = vld [vmem:[%s1 + $0x170] sm:$0xff]
        %v386 = vld [vmem:[%s1 + $0x178] sm:$0xff]
        %v387 = vld [vmem:[%s1 + $0x180] sm:$0xff]
        %v388 = vld [vmem:[%s1 + $0x188] sm:$0xff]
        %v389 = vld [vmem:[%s1 + $0x190] sm:$0xff]
        %v390 = vld [vmem:[%s1 + $0x198] sm:$0xff]
        %v391 = vld [vmem:[%s1 + $0x1a0] sm:$0xff]
        %v392 = vld [vmem:[%s1 + $0x1a8] sm:$0xff]
        %v393 = vld [vmem:[%s1 + $0x1b0] sm:$0xff]
        %v394 = vld [vmem:[%s1 + $0x1b8] sm:$0xff]
        %v395 = vld [vmem:[%s1 + $0x1c0] sm:$0xff]
        %v396 = vld [vmem:[%s1 + $0x1c8] sm:$0xff]
        %v397 = vld [vmem:[%s1 + $0x1d0] sm:$0xff]
        %v398 = vld [vmem:[%s1 + $0x1d8] sm:$0xff]
        %v399 = vld [vmem:[%s1 + $0x1e0] sm:$0xff]
        %v400 = vld [vmem:[%s1 + $0x1e8] sm:$0xff]
        %v401 = vld [vmem:[%s1 + $0x1f0] sm:$0xff]
        %v402 = vld [vmem:[%s1 + $0x1f8] sm:$0xff]
        %v403 = vld [vmem:[%s1 + $0x200] sm:$0xff]
        %v404 = vld [vmem:[%s1 + $0x208] sm:$0xff]
        %v405 = vld [vmem:[%s1 + $0x210] sm:$0xff]
        %v406 = vld [vmem:[%s1 + $0x218] sm:$0xff]
        %v407 = vld [vmem:[%s1 + $0x220] sm:$0xff]
        %v408 = vld [vmem:[%s1 + $0x228] sm:$0xff]
        %v409 = vld [vmem:[%s1 + $0x230] sm:$0xff]
        %v410 = vld [vmem:[%s1 + $0x238] sm:$0xff]
        %v411 = vld [vmem:[%s1 + $0x240] sm:$0xff]
        %v412 = vld [vmem:[%s1 + $0x248] sm:$0xff]
        %v413 = vld [vmem:[%s1 + $0x250] sm:$0xff]
        %v414 = vld [vmem:[%s1 + $0x258] sm:$0xff]
        %v415 = vld [vmem:[%s1 + $0x260] sm:$0xff]
        %v416 = vld [vmem:[%s1 + $0x268] sm:$0xff]
        %v417 = vld [vmem:[%s1 + $0x270] sm:$0xff]
        %v418 = vld [vmem:[%s1 + $0x278] sm:$0xff]
        %v419 = vld [vmem:[%s1 + $0x280] sm:$0xff]
        %v420 = vld [vmem:[%s1 + $0x288] sm:$0xff]
        %v421 = vld [vmem:[%s1 + $0x290] sm:$0xff]
        %v422 = vld [vmem:[%s1 + $0x298] sm:$0xff]
        %v423 = vld [vmem:[%s1 + $0x2a0] sm:$0xff]
        %v424 = vld [vmem:[%s1 + $0x2a8] sm:$0xff]
        %v425 = vld [vmem:[%s1 + $0x2b0] sm:$0xff]
        %v426 = vld [vmem:[%s1 + $0x2b8] sm:$0xff]
        %v427 = vld [vmem:[%s1 + $0x2c0] sm:$0xff]
        %v428 = vld [vmem:[%s1 + $0x2c8] sm:$0xff]
        %v429 = vld [vmem:[%s1 + $0x2d0] sm:$0xff]
        %v430 = vld [vmem:[%s1 + $0x2d8] sm:$0xff]
        %v431 = vld [vmem:[%s1 + $0x2e0] sm:$0xff]
        %v432 = vld [vmem:[%s1 + $0x2e8] sm:$0xff]
        %v433 = vld [vmem:[%s1 + $0x2f0] sm:$0xff]
        %v434 = vld [vmem:[%s1 + $0x2f8] sm:$0xff]
        %435 = vmatpush.msra.mxu0 %v354
        %436 = vmatpush.msra.mxu0 %v353
        %437 = vmatpush.msra.mxu0 %v352
        %438 = vmatpush.msra.mxu0 %v351
        %439 = vmatpush.msra.mxu0 %v350
        %440 = vmatpush.msra.mxu0 %v349
        %441 = vmatpush.msra.mxu0 %v348
        %442 = vmatpush.msra.mxu0 %v347
        %443 = vmatpush.msra.mxu0 %v346
        %444 = vmatpush.msra.mxu0 %v345
        %445 = vmatpush.msra.mxu0 %v344
        %446 = vmatpush.msra.mxu0 %v343
        %447 = vmatpush.msra.mxu0 %v342
        %448 = vmatpush.msra.mxu0 %v341
        %449 = vmatpush.msra.mxu0 %v340
        %450 = vmatpush.msra.mxu0 %v339
        %451 = vmatmul.f32.gmra.mxu0 %v230
        %v452 = vpop.f32.mrf.mxu0
        %v453 = vadd.f32 0.0, %v452
        %454 = vmatmul.f32.gmra.mxu0 %v239
        %v455 = vpop.f32.mrf.mxu0
        %v456 = vadd.f32 0.0, %v455
        %457 = vmatmul.f32.gmra.mxu0 %v248
        %v458 = vpop.f32.mrf.mxu0
        %v459 = vadd.f32 0.0, %v458
        %460 = vmatmul.f32.gmra.mxu0 %v257
        %v461 = vpop.f32.mrf.mxu0
        %v462 = vadd.f32 0.0, %v461
        %463 = vdwg.mxu0
        %464 = vmatpush.msra.mxu0 %v370
        %465 = vmatpush.msra.mxu0 %v369
        %466 = vmatpush.msra.mxu0 %v368
        %467 = vmatpush.msra.mxu0 %v367
        %468 = vmatpush.msra.mxu0 %v366
        %469 = vmatpush.msra.mxu0 %v365
        %470 = vmatpush.msra.mxu0 %v364
        %471 = vmatpush.msra.mxu0 %v363
        %472 = vmatpush.msra.mxu0 %v362
        %473 = vmatpush.msra.mxu0 %v361
        %474 = vmatpush.msra.mxu0 %v360
        %475 = vmatpush.msra.mxu0 %v359
        %476 = vmatpush.msra.mxu0 %v358
        %477 = vmatpush.msra.mxu0 %v357
        %478 = vmatpush.msra.mxu0 %v356
        %479 = vmatpush.msra.mxu0 %v355
        %480 = vmatmul.f32.gmra.mxu0 %v231
        %v481 = vpop.f32.mrf.mxu0
        %v482 = vadd.f32 %v453, %v481
        %483 = vmatmul.f32.gmra.mxu0 %v240
        %v484 = vpop.f32.mrf.mxu0
        %v485 = vadd.f32 %v456, %v484
        %486 = vmatmul.f32.gmra.mxu0 %v249
        %v487 = vpop.f32.mrf.mxu0
        %v488 = vadd.f32 %v459, %v487
        %489 = vmatmul.f32.gmra.mxu0 %v258
        %v490 = vpop.f32.mrf.mxu0
        %v491 = vadd.f32 %v462, %v490
        %492 = vdwg.mxu0
        %493 = vmatpush.msra.mxu0 %v386
        %494 = vmatpush.msra.mxu0 %v385
        %495 = vmatpush.msra.mxu0 %v384
        %496 = vmatpush.msra.mxu0 %v383
        %497 = vmatpush.msra.mxu0 %v382
        %498 = vmatpush.msra.mxu0 %v381
        %499 = vmatpush.msra.mxu0 %v380
        %500 = vmatpush.msra.mxu0 %v379
        %501 = vmatpush.msra.mxu0 %v378
        %502 = vmatpush.msra.mxu0 %v377
        %503 = vmatpush.msra.mxu0 %v376
        %504 = vmatpush.msra.mxu0 %v375
        %505 = vmatpush.msra.mxu0 %v374
        %506 = vmatpush.msra.mxu0 %v373
        %507 = vmatpush.msra.mxu0 %v372
        %508 = vmatpush.msra.mxu0 %v371
        %509 = vmatmul.f32.gmra.mxu0 %v232
        %v510 = vpop.f32.mrf.mxu0
        %v511 = vadd.f32 %v482, %v510
        %512 = vmatmul.f32.gmra.mxu0 %v241
        %v513 = vpop.f32.mrf.mxu0
        %v514 = vadd.f32 %v485, %v513
        %515 = vmatmul.f32.gmra.mxu0 %v250
        %v516 = vpop.f32.mrf.mxu0
        %v517 = vadd.f32 %v488, %v516
        %518 = vmatmul.f32.gmra.mxu0 %v259
        %v519 = vpop.f32.mrf.mxu0
        %v520 = vadd.f32 %v491, %v519
        %521 = vdwg.mxu0
        %522 = vmatpush.msra.mxu0 %v402
        %523 = vmatpush.msra.mxu0 %v401
        %524 = vmatpush.msra.mxu0 %v400
        %525 = vmatpush.msra.mxu0 %v399
        %526 = vmatpush.msra.mxu0 %v398
        %527 = vmatpush.msra.mxu0 %v397
        %528 = vmatpush.msra.mxu0 %v396
        %529 = vmatpush.msra.mxu0 %v395
        %530 = vmatpush.msra.mxu0 %v394
        %531 = vmatpush.msra.mxu0 %v393
        %532 = vmatpush.msra.mxu0 %v392
        %533 = vmatpush.msra.mxu0 %v391
        %534 = vmatpush.msra.mxu0 %v390
        %535 = vmatpush.msra.mxu0 %v389
        %536 = vmatpush.msra.mxu0 %v388
        %537 = vmatpush.msra.mxu0 %v387
        %538 = vmatmul.f32.gmra.mxu0 %v233
        %v539 = vpop.f32.mrf.mxu0
        %v540 = vadd.f32 %v511, %v539
        %541 = vmatmul.f32.gmra.mxu0 %v242
        %v542 = vpop.f32.mrf.mxu0
        %v543 = vadd.f32 %v514, %v542
        %544 = vmatmul.f32.gmra.mxu0 %v251
        %v545 = vpop.f32.mrf.mxu0
        %v546 = vadd.f32 %v517, %v545
        %547 = vmatmul.f32.gmra.mxu0 %v260
        %v548 = vpop.f32.mrf.mxu0
        %v549 = vadd.f32 %v520, %v548
        %550 = vdwg.mxu0
        %551 = vmatpush.msra.mxu0 %v418
        %552 = vmatpush.msra.mxu0 %v417
        %553 = vmatpush.msra.mxu0 %v416
        %554 = vmatpush.msra.mxu0 %v415
        %555 = vmatpush.msra.mxu0 %v414
        %556 = vmatpush.msra.mxu0 %v413
        %557 = vmatpush.msra.mxu0 %v412
        %558 = vmatpush.msra.mxu0 %v411
        %559 = vmatpush.msra.mxu0 %v410
        %560 = vmatpush.msra.mxu0 %v409
        %561 = vmatpush.msra.mxu0 %v408
        %562 = vmatpush.msra.mxu0 %v407
        %563 = vmatpush.msra.mxu0 %v406
        %564 = vmatpush.msra.mxu0 %v405
        %565 = vmatpush.msra.mxu0 %v404
        %566 = vmatpush.msra.mxu0 %v403
        %567 = vmatmul.f32.gmra.mxu0 %v234
        %v568 = vpop.f32.mrf.mxu0
        %v569 = vadd.f32 %v540, %v568
        %570 = vmatmul.f32.gmra.mxu0 %v243
        %v571 = vpop.f32.mrf.mxu0
        %v572 = vadd.f32 %v543, %v571
        %573 = vmatmul.f32.gmra.mxu0 %v252
        %v574 = vpop.f32.mrf.mxu0
        %v575 = vadd.f32 %v546, %v574
        %576 = vmatmul.f32.gmra.mxu0 %v261
        %v577 = vpop.f32.mrf.mxu0
        %v578 = vadd.f32 %v549, %v577
        %579 = vdwg.mxu0
        %580 = vmatpush.msra.mxu0 %v434
        %581 = vmatpush.msra.mxu0 %v433
        %582 = vmatpush.msra.mxu0 %v432
        %583 = vmatpush.msra.mxu0 %v431
        %584 = vmatpush.msra.mxu0 %v430
        %585 = vmatpush.msra.mxu0 %v429
        %586 = vmatpush.msra.mxu0 %v428
        %587 = vmatpush.msra.mxu0 %v427
        %588 = vmatpush.msra.mxu0 %v426
        %589 = vmatpush.msra.mxu0 %v425
        %590 = vmatpush.msra.mxu0 %v424
        %591 = vmatpush.msra.mxu0 %v423
        %592 = vmatpush.msra.mxu0 %v422
        %593 = vmatpush.msra.mxu0 %v421
        %594 = vmatpush.msra.mxu0 %v420
        %595 = vmatpush.msra.mxu0 %v419
        %596 = vmatmul.f32.gmra.mxu0 %v235
        %v597 = vpop.f32.mrf.mxu0
        %v598 = vadd.f32 %v569, %v597
        %599 = vmatmul.f32.gmra.mxu0 %v244
        %v600 = vpop.f32.mrf.mxu0
        %v601 = vadd.f32 %v572, %v600
        %602 = vmatmul.f32.gmra.mxu0 %v253
        %v603 = vpop.f32.mrf.mxu0
        %v604 = vadd.f32 %v575, %v603
        %605 = vmatmul.f32.gmra.mxu0 %v262
        %v606 = vpop.f32.mrf.mxu0
        %v607 = vadd.f32 %v578, %v606
        %608 = vdwg.mxu0
        %609 = vst [vmem:[#allocation2] sm:$0xff] %v598
        %610 = vst [vmem:[#allocation2 + $0x8] sm:$0xff] %v601
        %611 = vst [vmem:[#allocation2 + $0x10] sm:$0xff] %v604
        %612 = vst [vmem:[#allocation2 + $0x18] sm:$0xff] %v607
        %v613 = vld [vmem:[#allocation2] sm:$0xff]
        %v614 = vld [vmem:[#allocation2 + $0x8] sm:$0xff]
        %v615 = vld [vmem:[#allocation2 + $0x10] sm:$0xff]
        %v616 = vld [vmem:[#allocation2 + $0x18] sm:$0xff]
        %v617 = vld [vmem:[%s2] sm:$0xff]
        %v618 = vld [vmem:[%s2 + $0x8] sm:$0xff]
        %v619 = vld [vmem:[%s2 + $0x10] sm:$0xff]
        %v620 = vld [vmem:[%s2 + $0x18] sm:$0xff]
        %v621 = vld [vmem:[%s2 + $0x20] sm:$0xff]
        %v622 = vld [vmem:[%s2 + $0x28] sm:$0xff]
        %v623 = vld [vmem:[%s2 + $0x30] sm:$0xff]
        %v624 = vld [vmem:[%s2 + $0x38] sm:$0xff]
        %v625 = vld [vmem:[%s2 + $0x40] sm:$0xff]
        %v626 = vld [vmem:[%s2 + $0x48] sm:$0xff]
        %v627 = vld [vmem:[%s2 + $0x50] sm:$0xff]
        %v628 = vld [vmem:[%s2 + $0x58] sm:$0xff]
        %v629 = vld [vmem:[%s2 + $0x60] sm:$0xff]
        %v630 = vld [vmem:[%s2 + $0x68] sm:$0xff]
        %v631 = vld [vmem:[%s2 + $0x70] sm:$0xff]
        %v632 = vld [vmem:[%s2 + $0x78] sm:$0xff]
        %v633 = vld [vmem:[%s2 + $0x80] sm:$0xff]
        %v634 = vld [vmem:[%s2 + $0x88] sm:$0xff]
        %v635 = vld [vmem:[%s2 + $0x90] sm:$0xff]
        %v636 = vld [vmem:[%s2 + $0x98] sm:$0xff]
        %v637 = vld [vmem:[%s2 + $0xa0] sm:$0xff]
        %v638 = vld [vmem:[%s2 + $0xa8] sm:$0xff]
        %v639 = vld [vmem:[%s2 + $0xb0] sm:$0xff]
        %v640 = vld [vmem:[%s2 + $0xb8] sm:$0xff]
        %v641 = vld [vmem:[%s2 + $0xc0] sm:$0xff]
        %v642 = vld [vmem:[%s2 + $0xc8] sm:$0xff]
        %v643 = vld [vmem:[%s2 + $0xd0] sm:$0xff]
        %v644 = vld [vmem:[%s2 + $0xd8] sm:$0xff]
        %v645 = vld [vmem:[%s2 + $0xe0] sm:$0xff]
        %v646 = vld [vmem:[%s2 + $0xe8] sm:$0xff]
        %v647 = vld [vmem:[%s2 + $0xf0] sm:$0xff]
        %v648 = vld [vmem:[%s2 + $0xf8] sm:$0xff]
        %v649 = vld [vmem:[%s2 + $0x100] sm:$0xff]
        %v650 = vld [vmem:[%s2 + $0x108] sm:$0xff]
        %v651 = vld [vmem:[%s2 + $0x110] sm:$0xff]
        %v652 = vld [vmem:[%s2 + $0x118] sm:$0xff]
        %v653 = vld [vmem:[%s2 + $0x120] sm:$0xff]
        %v654 = vld [vmem:[%s2 + $0x128] sm:$0xff]
        %v655 = vld [vmem:[%s2 + $0x130] sm:$0xff]
        %v656 = vld [vmem:[%s2 + $0x138] sm:$0xff]
        %v657 = vld [vmem:[%s2 + $0x140] sm:$0xff]
        %v658 = vld [vmem:[%s2 + $0x148] sm:$0xff]
        %v659 = vld [vmem:[%s2 + $0x150] sm:$0xff]
        %v660 = vld [vmem:[%s2 + $0x158] sm:$0xff]
        %v661 = vld [vmem:[%s2 + $0x160] sm:$0xff]
        %v662 = vld [vmem:[%s2 + $0x168] sm:$0xff]
        %v663 = vld [vmem:[%s2 + $0x170] sm:$0xff]
        %v664 = vld [vmem:[%s2 + $0x178] sm:$0xff]
        %665 = vmatpush.msra.mxu0 %v632
        %666 = vmatpush.msra.mxu0 %v631
        %667 = vmatpush.msra.mxu0 %v630
        %668 = vmatpush.msra.mxu0 %v629
        %669 = vmatpush.msra.mxu0 %v628
        %670 = vmatpush.msra.mxu0 %v627
        %671 = vmatpush.msra.mxu0 %v626
        %672 = vmatpush.msra.mxu0 %v625
        %673 = vmatpush.msra.mxu0 %v624
        %674 = vmatpush.msra.mxu0 %v623
        %675 = vmatpush.msra.mxu0 %v622
        %676 = vmatpush.msra.mxu0 %v621
        %677 = vmatpush.msra.mxu0 %v620
        %678 = vmatpush.msra.mxu0 %v619
        %679 = vmatpush.msra.mxu0 %v618
        %680 = vmatpush.msra.mxu0 %v617
        %681 = vmatmul.f32.gmra.mxu0 %v293
        %v682 = vpop.f32.mrf.mxu0
        %v683 = vadd.f32 0.0, %v682
        %684 = vmatmul.f32.gmra.mxu0 %v302
        %v685 = vpop.f32.mrf.mxu0
        %v686 = vadd.f32 0.0, %v685
        %687 = vmatmul.f32.gmra.mxu0 %v311
        %v688 = vpop.f32.mrf.mxu0
        %v689 = vadd.f32 0.0, %v688
        %690 = vmatmul.f32.gmra.mxu0 %v320
        %v691 = vpop.f32.mrf.mxu0
        %v692 = vadd.f32 0.0, %v691
        %693 = vdwg.mxu0
        %694 = vmatpush.msra.mxu0 %v648
        %695 = vmatpush.msra.mxu0 %v647
        %696 = vmatpush.msra.mxu0 %v646
        %697 = vmatpush.msra.mxu0 %v645
        %698 = vmatpush.msra.mxu0 %v644
        %699 = vmatpush.msra.mxu0 %v643
        %700 = vmatpush.msra.mxu0 %v642
        %701 = vmatpush.msra.mxu0 %v641
        %702 = vmatpush.msra.mxu0 %v640
        %703 = vmatpush.msra.mxu0 %v639
        %704 = vmatpush.msra.mxu0 %v638
        %705 = vmatpush.msra.mxu0 %v637
        %706 = vmatpush.msra.mxu0 %v636
        %707 = vmatpush.msra.mxu0 %v635
        %708 = vmatpush.msra.mxu0 %v634
        %709 = vmatpush.msra.mxu0 %v633
        %710 = vmatmul.f32.gmra.mxu0 %v296
        %v711 = vpop.f32.mrf.mxu0
        %v712 = vadd.f32 %v683, %v711
        %713 = vmatmul.f32.gmra.mxu0 %v305
        %v714 = vpop.f32.mrf.mxu0
        %v715 = vadd.f32 %v686, %v714
        %716 = vmatmul.f32.gmra.mxu0 %v314
        %v717 = vpop.f32.mrf.mxu0
        %v718 = vadd.f32 %v689, %v717
        %719 = vmatmul.f32.gmra.mxu0 %v323
        %v720 = vpop.f32.mrf.mxu0
        %v721 = vadd.f32 %v692, %v720
        %722 = vdwg.mxu0
        %723 = vmatpush.msra.mxu0 %v664
        %724 = vmatpush.msra.mxu0 %v663
        %725 = vmatpush.msra.mxu0 %v662
        %726 = vmatpush.msra.mxu0 %v661
        %727 = vmatpush.msra.mxu0 %v660
        %728 = vmatpush.msra.mxu0 %v659
        %729 = vmatpush.msra.mxu0 %v658
        %730 = vmatpush.msra.mxu0 %v657
        %731 = vmatpush.msra.mxu0 %v656
        %732 = vmatpush.msra.mxu0 %v655
        %733 = vmatpush.msra.mxu0 %v654
        %734 = vmatpush.msra.mxu0 %v653
        %735 = vmatpush.msra.mxu0 %v652
        %736 = vmatpush.msra.mxu0 %v651
        %737 = vmatpush.msra.mxu0 %v650
        %738 = vmatpush.msra.mxu0 %v649
        %739 = vmatmul.f32.gmra.mxu0 %v299
        %v740 = vpop.f32.mrf.mxu0
        %v741 = vadd.f32 %v712, %v740
        %742 = vmatmul.f32.gmra.mxu0 %v308
        %v743 = vpop.f32.mrf.mxu0
        %v744 = vadd.f32 %v715, %v743
        %745 = vmatmul.f32.gmra.mxu0 %v317
        %v746 = vpop.f32.mrf.mxu0
        %v747 = vadd.f32 %v718, %v746
        %748 = vmatmul.f32.gmra.mxu0 %v326
        %v749 = vpop.f32.mrf.mxu0
        %v750 = vadd.f32 %v721, %v749
        %751 = vdwg.mxu0
        %v752 = vadd.f32 %v613, %v741
        %v753 = vadd.f32 %v614, %v744
        %v754 = vadd.f32 %v615, %v747
        %v755 = vadd.f32 %v616, %v750
        %756 = vst [vmem:[#allocation2] sm:$0xff] %v752
        %757 = vst [vmem:[#allocation2 + $0x8] sm:$0xff] %v753
        %758 = vst [vmem:[#allocation2 + $0x10] sm:$0xff] %v754
        %759 = vst [vmem:[#allocation2 + $0x18] sm:$0xff] %v755
        %v760 = vld [vmem:[#allocation2] sm:$0xff]
        %v761 = vld [vmem:[#allocation2 + $0x8] sm:$0xff]
        %v762 = vld [vmem:[#allocation2 + $0x10] sm:$0xff]
        %v763 = vld [vmem:[#allocation2 + $0x18] sm:$0xff]
        %v764 = vld [vmem:[%s3] sm:$0x1]
        %v766 = vperm.slane %v764, 0
        %v768 = vadd.f32 %v760, %v766
        %v769 = vadd.f32 %v761, %v766
        %v770 = vadd.f32 %v762, %v766
        %v771 = vadd.f32 %v763, %v766
        %772 = vst [vmem:[%s217] sm:$0xff] %v768
        %773 = vst [vmem:[%s217 + $0x8] sm:$0xff] %v769
        %774 = vst [vmem:[%s217 + $0x10] sm:$0xff] %v770
        %775 = vst [vmem:[%s217 + $0x18] sm:$0xff] %v771
        %s776 = sand.u32 %s131, 1
        %s777 = scalar_lea.sflag [#allocation4], %s776
        %s778 = sand.u32 %s131, 1
        %s779 = smul.addr %s778, 32
        %s780 = scalar_lea.vmem [#allocation3], %s779
        // Predicated region
        $region37: #{tpu_custom_call.1} parent=35 // pred_check
          %p781 = pneg %p141
        $region38: #{tpu_custom_call.1} parent=35 // pred_check_branch
          %783 = sbr.rel (%p781) target = $region40
        $region39: #{tpu_custom_call.1} parent=35 // pred_region
          %s784 = smul.u32 4, %s23
          %786 = vsyncadd %s777, 0
          %s787 = smul.addr %s22, 8
          %s788 = sadd.s32 %s784, %s787
          %s789 = smul.addr %s788, 8
          %s790 = scalar_lea.hbm %s4, %s789
          %s791 = sshll.u32 %s780, 4
          %s792 = int_to_ptr.vmem [resolvable:$true] %s791
          %s793 = sshll.u32 %s790, 4
          %s794 = int_to_ptr.hbm [resolvable:$true] %s793
          %799 = dma.vmem_to_hbm [thread:$0]  %s792, 512, %s794, %s777, 128, 128, 8
        $region40: #{tpu_custom_call.1} parent=35 // pred_fallthru
          _
      $region36: #{tpu_custom_call.1} parent=5 // pred_fallthru
        _
      %p800 = scmp.le.s32.totalorder 2, %s13
      // Predicated region
      $region41: #{tpu_custom_call.1} parent=5 // pred_check
        %p801 = pneg %p800
      $region42: #{tpu_custom_call.1} parent=5 // pred_check_branch
        %803 = sbr.rel (%p801) target = $region44
      $region43: #{tpu_custom_call.1} parent=5 // pred_region
        %s804 = ssub.s32 %s13, 2
        // Predicated region
        $region45: #{tpu_custom_call.1} parent=43 // pred_check
          %p805 = pneg %p147
        $region46: #{tpu_custom_call.1} parent=43 // pred_check_branch
          %807 = sbr.rel (%p805) target = $region48
        $region47: #{tpu_custom_call.1} parent=43 // pred_region
          %s808 = sand.u32 %s132, 1
          %s809 = scalar_lea.sflag [#allocation4], %s808
          %s810 = sand.u32 %s132, 1
          %s811 = smul.addr %s810, 32
          %s812 = scalar_lea.vmem [#allocation3], %s811
          %814 = dma.done %s809, 512
        $region48: #{tpu_custom_call.1} parent=43 // pred_fallthru
          _
      $region44: #{tpu_custom_call.1} parent=5 // pred_fallthru
        _
    $region6: #{tpu_custom_call.1} parent=1 // loop_footer
      %s17 = sadd.s32 1, %s13
    $region7: #{tpu_custom_call.1} parent=1 // loop_footer_branch
      %12 = sbr.rel target = $region3
    $region8: #{tpu_custom_call.1} parent=1 // loop_exit
      _
    %815 = vsyncpa [#allocation4], 1
    %s816 = scalar_lea.sflag [#allocation4], 1
    %817 = vsyncpa %s816, 1

</llo_original>
